<compile_context>
chip_gen: v7x
topology: tpu7x:2x2x1
jax: 0.10.0
libtpu: 0.0.40
codegen_flags: <defaults>
</compile_context>

<pallas_src>
import functools

import jax
import jax.numpy as jnp
from jax import lax
from jax.experimental import pallas as pl
from jax.experimental.pallas import tpu as pltpu


# ---------------------------------------------------------------------------
# Kernel: one (batch-tile, head) grid step.
#   x_ref   : (block_b, N, D)   input activations (original dtype)
#   wq_ref  : (1, D, Dh)  bf16  (softmax scale pre-folded)
#   wk_ref  : (1, D, Dh)  bf16
#   wv_ref  : (1, D, Dh)  bf16
#   wo_ref  : (1, Dh, D)  bf16  head-h slice of the output projection
#   bo_ref  : (1, 1, D)   f32   output-projection bias
#   o_ref   : (block_b, N, D)   output block (written on the last head step)
#   acc_ref : (block_b, N, D)   f32 accumulator, persists across head steps
# ---------------------------------------------------------------------------
def _mha_head_kernel(x_ref, wq_ref, wk_ref, wv_ref, wo_ref, bo_ref, o_ref,
                     acc_ref, *, block_b, approx_reciprocal):
    h = pl.program_id(1)

    @pl.when(h == 0)
    def _init():
        acc_ref[...] = jnp.zeros_like(acc_ref)

    wq = wq_ref[0]                                           # (D, Dh) bf16
    wk = wk_ref[0]
    wv = wv_ref[0]
    wo = wo_ref[0]                                           # (Dh, D) bf16

    # Small static loop over the batch elements in this block; every matmul is
    # a plain 2-D MXU dot (simple, well-supported lowering).
    for bb in range(block_b):
        xb = x_ref[bb].astype(jnp.bfloat16)                  # (N, D)

        # Per-head QKV projection (contraction over the full model dim D).
        q = jnp.dot(xb, wq, preferred_element_type=jnp.float32)   # (N, Dh)
        k = jnp.dot(xb, wk, preferred_element_type=jnp.float32)
        v = jnp.dot(xb, wv, preferred_element_type=jnp.float32)

        # Scores: contract the Dh axis of q and k directly (no k.T slab).
        s = lax.dot_general(q.astype(jnp.bfloat16), k.astype(jnp.bfloat16),
                            dimension_numbers=(((1,), (1,)), ((), ())),
                            preferred_element_type=jnp.float32)   # (N, N) f32

        # Numerically stable softmax numerator in f32 (VPU/EUP path).
        m = jnp.max(s, axis=-1, keepdims=True)
        p = jnp.exp(s - m)
        denom = jnp.sum(p, axis=-1, keepdims=True)

        # Normalize AFTER the PV matmul: N*Dh multiplies instead of N*N.
        pv = jnp.dot(p.astype(jnp.bfloat16), v.astype(jnp.bfloat16),
                     preferred_element_type=jnp.float32)          # (N, Dh)
        if approx_reciprocal:
            inv = pl.reciprocal(denom, approx=True)
        else:
            inv = 1.0 / denom
        o_h = pv * inv

        # concat_h(o_h) @ W_out  ==  sum_h  o_h @ W_out[h]  (accumulate).
        acc_ref[bb] += jnp.dot(o_h.astype(jnp.bfloat16), wo,
                               preferred_element_type=jnp.float32)

    @pl.when(h == pl.num_programs(1) - 1)
    def _finalize():
        # Dropout(p=0) == identity.
        o_ref[...] = (acc_ref[...] + bo_ref[...]).astype(o_ref.dtype)


# ---------------------------------------------------------------------------
# Wrapper (assumes project_out=True, i.e. not (heads==1 and dim_head==dim)).
# ---------------------------------------------------------------------------
def mh_attention(x, params, *, heads, dim_head, block_b=1,
                 approx_reciprocal=True):
    """Forward pass matching MHAttention.forward (dropout p=0)."""
    B, N, D = x.shape
    inner = heads * dim_head
    scale = dim_head ** (-0.5)

    assert not (heads == 1 and dim_head == D), \
        "project_out=False (Identity) path not implemented"
    assert B % block_b == 0, "block_b must divide the batch size"

    w_qkv = jnp.asarray(params["w_qkv"])          # (D, 3*inner), (in, out)
    w_out = jnp.asarray(params["w_out"])          # (inner, D)
    b_out = jnp.asarray(params["b_out"])          # (D,)

    wq, wk, wv = jnp.split(w_qkv, 3, axis=-1)     # each (D, inner)

    def per_head(w):                              # (D, inner) -> (H, D, Dh)
        return jnp.transpose(w.reshape(D, heads, dim_head), (1, 0, 2))

    # One-time wrapper-side layout + cast: bf16 weights, scale folded into W_q.
    wq_h = (per_head(wq) * scale).astype(jnp.bfloat16)      # (H, D, Dh)
    wk_h = per_head(wk).astype(jnp.bfloat16)                # (H, D, Dh)
    wv_h = per_head(wv).astype(jnp.bfloat16)                # (H, D, Dh)
    wo_h = w_out.reshape(heads, dim_head, D).astype(jnp.bfloat16)  # (H, Dh, D)
    bo = b_out.reshape(1, 1, D).astype(jnp.float32)

    kernel = functools.partial(_mha_head_kernel, block_b=block_b,
                               approx_reciprocal=approx_reciprocal)

    grid = (B // block_b, heads)

    # Advisory cost estimate so XLA schedules around the custom call sensibly.
    flops = (2 * B * N * D * 3 * inner            # QKV projection
             + 4 * B * heads * N * N * dim_head   # scores + PV
             + 2 * B * N * inner * D)             # output projection
    bytes_accessed = (x.size * x.dtype.itemsize
                      + 2 * (wq_h.size + wk_h.size + wv_h.size + wo_h.size)
                      + bo.size * 4
                      + B * N * D * x.dtype.itemsize)
    cost = pl.CostEstimate(flops=flops,
                           transcendentals=B * heads * N * N,
                           bytes_accessed=bytes_accessed)

    # Rough per-step VMEM need (f32 score slab dominates once N grows); raise
    # v5e's 16 MiB scoped default, stay within v7x's 64 MiB physical VMEM.
    step_bytes = (4 * block_b * N * N * 2                      # s, p
                  + 4 * block_b * N * (3 * dim_head + 2 * D)   # q/k/v, acc
                  + 2 * 2 * (3 * D * dim_head + dim_head * D)  # dbl-buf weights
                  + 4 * 2 * block_b * N * D)                   # dbl-buf x / out
    vmem_limit = int(min(max(32 * 1024 * 1024, 2 * step_bytes),
                         64 * 1024 * 1024))

    return pl.pallas_call(
        kernel,
        out_shape=jax.ShapeDtypeStruct((B, N, D), x.dtype),
        grid=grid,
        in_specs=[
            pl.BlockSpec((block_b, N, D), lambda b, h: (b, 0, 0)),   # x
            pl.BlockSpec((1, D, dim_head), lambda b, h: (h, 0, 0)),  # W_q[h]
            pl.BlockSpec((1, D, dim_head), lambda b, h: (h, 0, 0)),  # W_k[h]
            pl.BlockSpec((1, D, dim_head), lambda b, h: (h, 0, 0)),  # W_v[h]
            pl.BlockSpec((1, dim_head, D), lambda b, h: (h, 0, 0)),  # W_out[h]
            pl.BlockSpec((1, 1, D), lambda b, h: (0, 0, 0)),         # bias
        ],
        out_specs=pl.BlockSpec((block_b, N, D), lambda b, h: (b, 0, 0)),
        scratch_shapes=[pltpu.VMEM((block_b, N, D), jnp.float32)],
        compiler_params=pltpu.CompilerParams(
            dimension_semantics=("parallel", "arbitrary"),
            vmem_limit_bytes=vmem_limit),
        cost_estimate=cost,
    )(x, wq_h, wk_h, wv_h, wo_h, bo)


# ---------------------------------------------------------------------------
# Pure-JAX reference (f32) for a correctness sanity check.
# ---------------------------------------------------------------------------
def _mha_reference(x, params, *, heads, dim_head):
    B, N, D = x.shape
    inner = heads * dim_head
    scale = dim_head ** (-0.5)
    qkv = x @ params["w_qkv"]                                  # (B, N, 3*inner)
    q, k, v = jnp.split(qkv, 3, axis=-1)

    def split_heads(t):
        return jnp.transpose(t.reshape(B, N, heads, dim_head), (0, 2, 1, 3))

    q, k, v = map(split_heads, (q, k, v))                      # (B, H, N, Dh)
    dots = jnp.einsum("bhid,bhjd->bhij", q, k) * scale
    attn = jax.nn.softmax(dots, axis=-1)
    out = jnp.einsum("bhij,bhjd->bhid", attn, v)
    out = jnp.transpose(out, (0, 2, 1, 3)).reshape(B, N, inner)
    return out @ params["w_out"] + params["b_out"]


# ---------------------------------------------------------------------------
# Main
# ---------------------------------------------------------------------------
if __name__ == "__main__":
    # Small shapes; heads / dim_head use the module defaults (8, 64).
    B, N, DIM = 2, 8, 32
    HEADS, DIM_HEAD = 8, 64
    INNER = HEADS * DIM_HEAD          # 512; heads != 1 -> project_out = True

    key = jax.random.PRNGKey(0)
    kx, kqkv, kwo, kbo = jax.random.split(key, 4)

    x = jax.random.normal(kx, (B, N, DIM), dtype=jnp.float32)

    # PyTorch Linear weight is (out, in); we store the transposed (in, out)
    # matrices directly so y = x @ W.
    params = {
        "w_qkv": 0.05 * jax.random.normal(kqkv, (DIM, 3 * INNER),
                                          dtype=jnp.float32),
        "w_out": 0.05 * jax.random.normal(kwo, (INNER, DIM),
                                          dtype=jnp.float32),
        "b_out": 0.05 * jax.random.normal(kbo, (DIM,), dtype=jnp.float32),
    }

    y = mh_attention(x, params, heads=HEADS, dim_head=DIM_HEAD, block_b=1)
    y = jax.block_until_ready(y)

    assert y.shape == (B, N, DIM) and y.dtype == jnp.float32
    y_ref = _mha_reference(x, params, heads=HEADS, dim_head=DIM_HEAD)
    assert jnp.allclose(y, y_ref, atol=5e-2, rtol=5e-2), "mismatch vs reference"

    print("KERNEL_OK")
</pallas_src>

<mosaic_0001>
module attributes {stable_mosaic.version = 11 : i64} {
  func.func @_mha_head_kernel(%arg0: i32, %arg1: i32, %arg2: memref<1x8x32xf32, #tpu.memory_space<vmem>>, %arg3: memref<1x32x64xbf16, #tpu.memory_space<vmem>>, %arg4: memref<1x32x64xbf16, #tpu.memory_space<vmem>>, %arg5: memref<1x32x64xbf16, #tpu.memory_space<vmem>>, %arg6: memref<1x64x32xbf16, #tpu.memory_space<vmem>>, %arg7: memref<1x1x32xf32, #tpu.memory_space<vmem>>, %arg8: memref<1x8x32xf32, #tpu.memory_space<vmem>>, %arg9: memref<1x8x32xf32, #tpu.memory_space<vmem>>) attributes {dimension_semantics = [#tpu.dimension_semantics<parallel>, #tpu.dimension_semantics<arbitrary>], iteration_bounds = array<i64: 2, 8>, scalar_prefetch = 0 : i64, scratch_operands = 1 : i64, tpu.core_type = #tpu.core_type<tc>, window_params = [{transform_indices = @transform_0, window_bounds = array<i64: 1, 8, 32>}, {transform_indices = @transform_1, window_bounds = array<i64: 1, 32, 64>}, {transform_indices = @transform_2, window_bounds = array<i64: 1, 32, 64>}, {transform_indices = @transform_3, window_bounds = array<i64: 1, 32, 64>}, {transform_indices = @transform_4, window_bounds = array<i64: 1, 64, 32>}, {pipeline_mode = #tpu.pipeline_mode<synchronous>, transform_indices = @transform_5, window_bounds = array<i64: 1, 1, 32>}, {transform_indices = @transform_6, window_bounds = array<i64: 1, 8, 32>}]} {
    %c0_i32 = arith.constant 0 : i32
    %0 = arith.cmpi eq, %arg1, %c0_i32 : i32
    %1 = arith.extui %0 : i1 to i32
    %c0_i32_0 = arith.constant 0 : i32
    %2 = arith.cmpi ne, %1, %c0_i32_0 : i32
    scf.if %2 {
      %cst_29 = arith.constant 0.000000e+00 : f32
      %44 = vector.broadcast %cst_29 : f32 to vector<1x8x32xf32>
      %c0_30 = arith.constant 0 : index
      %c0_31 = arith.constant 0 : index
      %c0_32 = arith.constant 0 : index
      %45 = vector.load %arg9[%c0_30, %c0_31, %c0_32] : memref<1x8x32xf32, #tpu.memory_space<vmem>>, vector<1x8x32xf32>
      tpu.vector_store %arg9[%c0_30, %c0_31, %c0_32], %44 {strides = array<i32>} : memref<1x8x32xf32, #tpu.memory_space<vmem>>, vector<1x8x32xf32>,
    } else {
    }
    %c0 = arith.constant 0 : index
    %c0_1 = arith.constant 0 : index
    %c0_2 = arith.constant 0 : index
    %3 = vector.load %arg3[%c0, %c0_1, %c0_2] : memref<1x32x64xbf16, #tpu.memory_space<vmem>>, vector<1x32x64xbf16>
    %4 = vector.shape_cast %3 : vector<1x32x64xbf16> to vector<32x64xbf16>
    %c0_3 = arith.constant 0 : index
    %c0_4 = arith.constant 0 : index
    %c0_5 = arith.constant 0 : index
    %5 = vector.load %arg4[%c0_3, %c0_4, %c0_5] : memref<1x32x64xbf16, #tpu.memory_space<vmem>>, vector<1x32x64xbf16>
    %6 = vector.shape_cast %5 : vector<1x32x64xbf16> to vector<32x64xbf16>
    %c0_6 = arith.constant 0 : index
    %c0_7 = arith.constant 0 : index
    %c0_8 = arith.constant 0 : index
    %7 = vector.load %arg5[%c0_6, %c0_7, %c0_8] : memref<1x32x64xbf16, #tpu.memory_space<vmem>>, vector<1x32x64xbf16>
    %8 = vector.shape_cast %7 : vector<1x32x64xbf16> to vector<32x64xbf16>
    %c0_9 = arith.constant 0 : index
    %c0_10 = arith.constant 0 : index
    %c0_11 = arith.constant 0 : index
    %9 = vector.load %arg6[%c0_9, %c0_10, %c0_11] : memref<1x64x32xbf16, #tpu.memory_space<vmem>>, vector<1x64x32xbf16>
    %10 = vector.shape_cast %9 : vector<1x64x32xbf16> to vector<64x32xbf16>
    %c0_12 = arith.constant 0 : index
    %c0_13 = arith.constant 0 : index
    %c0_14 = arith.constant 0 : index
    %11 = vector.load %arg2[%c0_12, %c0_13, %c0_14] : memref<1x8x32xf32, #tpu.memory_space<vmem>>, vector<1x8x32xf32>
    %12 = vector.shape_cast %11 : vector<1x8x32xf32> to vector<8x32xf32>
    %13 = arith.truncf %12 : vector<8x32xf32> to vector<8x32xbf16>
    %cst = arith.constant dense<0.000000e+00> : vector<8x64xf32>
    %14 = tpu.matmul %13, %4, %cst {dimension_numbers = #tpu.dot_dimension_numbers<[1], [0], [0], [1], [0, 0, 1, 1], [], []>} : vector<8x32xbf16>, vector<32x64xbf16>, vector<8x64xf32> -> vector<8x64xf32>
    %cst_15 = arith.constant dense<0.000000e+00> : vector<8x64xf32>
    %15 = tpu.matmul %13, %6, %cst_15 {dimension_numbers = #tpu.dot_dimension_numbers<[1], [0], [0], [1], [0, 0, 1, 1], [], []>} : vector<8x32xbf16>, vector<32x64xbf16>, vector<8x64xf32> -> vector<8x64xf32>
    %cst_16 = arith.constant dense<0.000000e+00> : vector<8x64xf32>
    %16 = tpu.matmul %13, %8, %cst_16 {dimension_numbers = #tpu.dot_dimension_numbers<[1], [0], [0], [1], [0, 0, 1, 1], [], []>} : vector<8x32xbf16>, vector<32x64xbf16>, vector<8x64xf32> -> vector<8x64xf32>
    %17 = arith.truncf %14 : vector<8x64xf32> to vector<8x64xbf16>
    %18 = arith.truncf %15 : vector<8x64xf32> to vector<8x64xbf16>
    %cst_17 = arith.constant dense<0.000000e+00> : vector<8x8xf32>
    %19 = tpu.matmul %17, %18, %cst_17 {dimension_numbers = #tpu.dot_dimension_numbers<[1], [1], [0], [0], [0, 0, 1, 0], [], []>} : vector<8x64xbf16>, vector<8x64xbf16>, vector<8x8xf32> -> vector<8x8xf32>
    %cst_18 = arith.constant dense<0xFF800000> : vector<8xf32>
    %20 = vector.multi_reduction <maximumf>, %19, %cst_18 [1] : vector<8x8xf32> to vector<8xf32>
    %21 = vector.shape_cast %20 : vector<8xf32> to vector<8x1xf32>
    %22 = vector.broadcast %21 : vector<8x1xf32> to vector<8x8xf32>
    %23 = arith.subf %19, %22 : vector<8x8xf32>
    %24 = math.exp %23 : vector<8x8xf32>
    %cst_19 = arith.constant dense<0.000000e+00> : vector<8xf32>
    %25 = vector.multi_reduction <add>, %24, %cst_19 [1] : vector<8x8xf32> to vector<8xf32>
    %26 = vector.shape_cast %25 : vector<8xf32> to vector<8x1xf32>
    %27 = arith.truncf %24 : vector<8x8xf32> to vector<8x8xbf16>
    %28 = arith.truncf %16 : vector<8x64xf32> to vector<8x64xbf16>
    %cst_20 = arith.constant dense<0.000000e+00> : vector<8x64xf32>
    %29 = tpu.matmul %27, %28, %cst_20 {dimension_numbers = #tpu.dot_dimension_numbers<[1], [0], [0], [1], [0, 0, 1, 1], [], []>} : vector<8x8xbf16>, vector<8x64xbf16>, vector<8x64xf32> -> vector<8x64xf32>
    %30 = tpu.reciprocal %26 {approx = true} : vector<8x1xf32> -> vector<8x1xf32>
    %31 = vector.broadcast %30 : vector<8x1xf32> to vector<8x64xf32>
    %32 = arith.mulf %29, %31 : vector<8x64xf32>
    %c0_21 = arith.constant 0 : index
    %c0_22 = arith.constant 0 : index
    %c0_23 = arith.constant 0 : index
    %33 = vector.load %arg9[%c0_21, %c0_22, %c0_23] : memref<1x8x32xf32, #tpu.memory_space<vmem>>, vector<1x8x32xf32>
    %34 = vector.shape_cast %33 : vector<1x8x32xf32> to vector<8x32xf32>
    %35 = arith.truncf %32 : vector<8x64xf32> to vector<8x64xbf16>
    %cst_24 = arith.constant dense<0.000000e+00> : vector<8x32xf32>
    %36 = tpu.matmul %35, %10, %cst_24 {dimension_numbers = #tpu.dot_dimension_numbers<[1], [0], [0], [1], [0, 0, 1, 1], [], []>} : vector<8x64xbf16>, vector<64x32xbf16>, vector<8x32xf32> -> vector<8x32xf32>
    %37 = arith.addf %34, %36 : vector<8x32xf32>
    %c0_25 = arith.constant 0 : index
    %c0_26 = arith.constant 0 : index
    %c0_27 = arith.constant 0 : index
    %38 = vector.load %arg9[%c0_25, %c0_26, %c0_27] : memref<1x8x32xf32, #tpu.memory_space<vmem>>, vector<1x8x32xf32>
    %39 = vector.shape_cast %38 : vector<1x8x32xf32> to vector<8x32xf32>
    %40 = vector.shape_cast %37 : vector<8x32xf32> to vector<1x8x32xf32>
    tpu.vector_store %arg9[%c0_25, %c0_26, %c0_27], %40 {strides = array<i32>} : memref<1x8x32xf32, #tpu.memory_space<vmem>>, vector<1x8x32xf32>,
    %c7_i32 = arith.constant 7 : i32
    %41 = arith.cmpi eq, %arg1, %c7_i32 : i32
    %42 = arith.extui %41 : i1 to i32
    %c0_i32_28 = arith.constant 0 : i32
    %43 = arith.cmpi ne, %42, %c0_i32_28 : i32
    scf.if %43 {
      %c0_29 = arith.constant 0 : index
      %c0_30 = arith.constant 0 : index
      %c0_31 = arith.constant 0 : index
      %44 = vector.load %arg9[%c0_29, %c0_30, %c0_31] : memref<1x8x32xf32, #tpu.memory_space<vmem>>, vector<1x8x32xf32>
      %c0_32 = arith.constant 0 : index
      %c0_33 = arith.constant 0 : index
      %c0_34 = arith.constant 0 : index
      %45 = vector.load %arg7[%c0_32, %c0_33, %c0_34] : memref<1x1x32xf32, #tpu.memory_space<vmem>>, vector<1x1x32xf32>
      %46 = vector.broadcast %45 : vector<1x1x32xf32> to vector<1x8x32xf32>
      %47 = arith.addf %44, %46 : vector<1x8x32xf32>
      %c0_35 = arith.constant 0 : index
      %c0_36 = arith.constant 0 : index
      %c0_37 = arith.constant 0 : index
      %48 = vector.load %arg8[%c0_35, %c0_36, %c0_37] : memref<1x8x32xf32, #tpu.memory_space<vmem>>, vector<1x8x32xf32>
      tpu.vector_store %arg8[%c0_35, %c0_36, %c0_37], %47 {strides = array<i32>} : memref<1x8x32xf32, #tpu.memory_space<vmem>>, vector<1x8x32xf32>,
    } else {
    }
    return
  }
  func.func @transform_0(%arg0: i32, %arg1: i32) -> (i32, i32, i32) {
    %c0_i32 = arith.constant 0 : i32
    %c0_i32_0 = arith.constant 0 : i32
    %c0_i32_1 = arith.constant 0 : i32
    return %arg0, %c0_i32, %c0_i32_0 : i32, i32, i32
  }
  func.func @transform_1(%arg0: i32, %arg1: i32) -> (i32, i32, i32) {
    %c0_i32 = arith.constant 0 : i32
    %c0_i32_0 = arith.constant 0 : i32
    %c0_i32_1 = arith.constant 0 : i32
    return %arg1, %c0_i32, %c0_i32_0 : i32, i32, i32
  }
  func.func @transform_2(%arg0: i32, %arg1: i32) -> (i32, i32, i32) {
    %c0_i32 = arith.constant 0 : i32
    %c0_i32_0 = arith.constant 0 : i32
    %c0_i32_1 = arith.constant 0 : i32
    return %arg1, %c0_i32, %c0_i32_0 : i32, i32, i32
  }
  func.func @transform_3(%arg0: i32, %arg1: i32) -> (i32, i32, i32) {
    %c0_i32 = arith.constant 0 : i32
    %c0_i32_0 = arith.constant 0 : i32
    %c0_i32_1 = arith.constant 0 : i32
    return %arg1, %c0_i32, %c0_i32_0 : i32, i32, i32
  }
  func.func @transform_4(%arg0: i32, %arg1: i32) -> (i32, i32, i32) {
    %c0_i32 = arith.constant 0 : i32
    %c0_i32_0 = arith.constant 0 : i32
    %c0_i32_1 = arith.constant 0 : i32
    return %arg1, %c0_i32, %c0_i32_0 : i32, i32, i32
  }
  func.func @transform_5(%arg0: i32, %arg1: i32) -> (i32, i32, i32) {
    %c0_i32 = arith.constant 0 : i32
    %c0_i32_0 = arith.constant 0 : i32
    %c0_i32_1 = arith.constant 0 : i32
    %c0_i32_2 = arith.constant 0 : i32
    return %c0_i32, %c0_i32_0, %c0_i32_1 : i32, i32, i32
  }
  func.func @transform_6(%arg0: i32, %arg1: i32) -> (i32, i32, i32) {
    %c0_i32 = arith.constant 0 : i32
    %c0_i32_0 = arith.constant 0 : i32
    %c0_i32_1 = arith.constant 0 : i32
    return %arg0, %c0_i32, %c0_i32_0 : i32, i32, i32
  }
}

</mosaic_0001>

<llo_original>
// kernel: tpu_custom_call.1
$region0: #{tpu_custom_call.1}
  #allocation0 [shape = 'u32[]', space=smem, size = 0x4, offset = 0x4, fixed_abs, tag = 'smem constant byte address 0x4 - core index']
  #allocation1 [shape = 'u32[144,128]{1,0:T(1,128)}', space=vmem, size = 0x12000, scoped, tag = 'internal scratch']
  #allocation2 [shape = 'f32[1,8,32]{2,1,0:T(8,128)}', space=vmem, size = 0x1000, scoped, tag = 'scratch operand']
  %s0 = inlined_call_operand.hbm [shape: f32[2,8,32], index: 0, kind: input, shape index: {}]
  %s1 = inlined_call_operand.vmem [shape: bf16[8,32,64], index: 1, kind: input, shape index: {}]
  %s2 = inlined_call_operand.vmem [shape: bf16[8,32,64], index: 2, kind: input, shape index: {}]
  %s3 = inlined_call_operand.vmem [shape: bf16[8,32,64], index: 3, kind: input, shape index: {}]
  %s4 = inlined_call_operand.vmem [shape: bf16[8,64,32], index: 4, kind: input, shape index: {}]
  %s5 = inlined_call_operand.vmem [shape: f32[1,1,32], index: 5, kind: input, shape index: {}]
  %s6 = inlined_call_operand.hbm [shape: f32[2,8,32], index: 6, kind: output, shape index: {}]
  %s7 = sld [smem:[#allocation0]]
  $region69: #{tpu_custom_call.1} parent=0
    _
  %s9 = ssub.s32 1, %s7
  %s10 = scalar_select 0, %s9, %s7
  $region1: #{tpu_custom_call.1} parent=0
    #allocation3 [shape = 'u8[8192]{0}', space=vmem, size = 0x2000, scoped, tag = 'input window, operand 0']
    #allocation4 [shape = 's32[2]{0}', space=sflag, size = 0x8, scoped, tag = 'scoped memory for tpu_custom_call.1']
    #allocation5 [shape = 's32[2]{0}', space=sflag, size = 0x8, scoped, tag = 'scoped memory for tpu_custom_call.1']
    #allocation6 [shape = 'u8[8192]{0}', space=vmem, size = 0x2000, scoped, tag = 'output window, operand 0']
    %11 = vsyncpa [#allocation4], 0
    %s12 = scalar_lea.sflag [#allocation4], 1
    %13 = vsyncpa %s12, 0
    %14 = vsyncpa [#allocation5], 0
    %s15 = scalar_lea.sflag [#allocation5], 1
    %16 = vsyncpa %s15, 0
    loop: start=0, step=1, limit=18
    $region2: #{tpu_custom_call.1} parent=1 // loop_pre_header
      _
    $region3: #{tpu_custom_call.1} parent=1 // loop_header
      %s18 = sphi 0, %s22
      %p19 = scmp.ge.s32.totalorder %s18, 18
      %s25 = sphi 0, %s37
      %s26 = sphi 0, %s33
      %s27 = sphi 0, %s25
      %s28 = sphi 0, %s26
      %s29 = sphi 0, %s27
      %s30 = sphi 0, %s28
      %s40 = sphi 0, %s42
      %s43 = sphi 0, %s40
      %s44 = sphi 0, %s43
      %s60 = sphi 0, %s44
      %s66 = sphi 0, %s68
      %s69 = sphi 0, %s66
      %s70 = sphi 0, %s69
      %s86 = sphi 0, %s70
      %s92 = sphi 0, %s94
      %s95 = sphi 0, %s92
      %s96 = sphi 0, %s95
      %s112 = sphi 0, %s96
      %s118 = sphi 0, %s120
      %s121 = sphi 0, %s118
      %s122 = sphi 0, %s121
      %s138 = sphi 0, %s122
      %s144 = sphi 0, %s146
      %s147 = sphi 0, %s144
      %s148 = sphi 0, %s147
      %s164 = sphi 0, %s148
      %s168 = sphi 0, %s168
      %s170 = sphi 0, %s168
      %s171 = sphi 0, %s170
      %s185 = sphi 0, %s171
      %s191 = sphi 0, %s193
      %s194 = sphi 0, %s191
      %s195 = sphi 0, %s194
      %s211 = sphi 0, %s195
    $region4: #{tpu_custom_call.1} parent=1 // loop_header_branch
      %21 = sbr.rel (%p19) target = $region8
    $region5: #{tpu_custom_call.1} parent=1 // loop_body
      %s23 = ssub.s32 %s18, 1
      %s24 = ssub.s32 %s18, 2
      %s31 = sadd.s32 1, %s26
      %p32 = scmp.ge.s32.totalorder %s31, 8
      %s33 = scalar_select %p32, 0, %s31
      %s34 = sadd.s32 1, %s25
      %s35 = scalar_select %p32, %s34, %s25
      %p36 = scmp.ge.s32.totalorder %s35, 2
      %s37 = scalar_select %p36, 0, %s35
      %s38 = ssub.s32 %s25, %s37
      %p39 = scmp.eq.s32.totalorder %s38, 0
      %s41 = sadd.s32 %s40, 1
      %s42 = scalar_select %p39, %s40, %s41
      %p45 = pneg %p39
      %p46 = scmp.eq.s32.totalorder %s18, 15
      %p47 = por %p45, %p46
      %p48 = scmp.ne.s32.totalorder %s40, %s43
      %p49 = scmp.eq.s32.totalorder %s18, 0
      %p50 = por %p48, %p49
      %p51 = scmp.ne.s32.totalorder %s40, %s43
      %p52 = scmp.eq.s32.totalorder %s23, 15
      %p53 = por %p51, %p52
      %p54 = scmp.ne.s32.totalorder %s43, %s44
      %p55 = scmp.eq.s32.totalorder %s23, 0
      %p56 = por %p54, %p55
      %p57 = scmp.ne.s32.totalorder %s43, %s44
      %p58 = scmp.eq.s32.totalorder %s24, 15
      %p59 = por %p57, %p58
      %p61 = scmp.ne.s32.totalorder %s44, %s60
      %p62 = scmp.eq.s32.totalorder %s24, 0
      %p63 = por %p61, %p62
      %s64 = ssub.s32 %s26, %s33
      %p65 = scmp.eq.s32.totalorder %s64, 0
      %s67 = sadd.s32 %s66, 1
      %s68 = scalar_select %p65, %s66, %s67
      %p71 = pneg %p65
      %p72 = scmp.eq.s32.totalorder %s18, 15
      %p73 = por %p71, %p72
      %p74 = scmp.ne.s32.totalorder %s66, %s69
      %p75 = scmp.eq.s32.totalorder %s18, 0
      %p76 = por %p74, %p75
      %p77 = scmp.ne.s32.totalorder %s66, %s69
      %p78 = scmp.eq.s32.totalorder %s23, 15
      %p79 = por %p77, %p78
      %p80 = scmp.ne.s32.totalorder %s69, %s70
      %p81 = scmp.eq.s32.totalorder %s23, 0
      %p82 = por %p80, %p81
      %p83 = scmp.ne.s32.totalorder %s69, %s70
      %p84 = scmp.eq.s32.totalorder %s24, 15
      %p85 = por %p83, %p84
      %p87 = scmp.ne.s32.totalorder %s70, %s86
      %p88 = scmp.eq.s32.totalorder %s24, 0
      %p89 = por %p87, %p88
      %s90 = ssub.s32 %s26, %s33
      %p91 = scmp.eq.s32.totalorder %s90, 0
      %s93 = sadd.s32 %s92, 1
      %s94 = scalar_select %p91, %s92, %s93
      %p97 = pneg %p91
      %p98 = scmp.eq.s32.totalorder %s18, 15
      %p99 = por %p97, %p98
      %p100 = scmp.ne.s32.totalorder %s92, %s95
      %p101 = scmp.eq.s32.totalorder %s18, 0
      %p102 = por %p100, %p101
      %p103 = scmp.ne.s32.totalorder %s92, %s95
      %p104 = scmp.eq.s32.totalorder %s23, 15
      %p105 = por %p103, %p104
      %p106 = scmp.ne.s32.totalorder %s95, %s96
      %p107 = scmp.eq.s32.totalorder %s23, 0
      %p108 = por %p106, %p107
      %p109 = scmp.ne.s32.totalorder %s95, %s96
      %p110 = scmp.eq.s32.totalorder %s24, 15
      %p111 = por %p109, %p110
      %p113 = scmp.ne.s32.totalorder %s96, %s112
      %p114 = scmp.eq.s32.totalorder %s24, 0
      %p115 = por %p113, %p114
      %s116 = ssub.s32 %s26, %s33
      %p117 = scmp.eq.s32.totalorder %s116, 0
      %s119 = sadd.s32 %s118, 1
      %s120 = scalar_select %p117, %s118, %s119
      %p123 = pneg %p117
      %p124 = scmp.eq.s32.totalorder %s18, 15
      %p125 = por %p123, %p124
      %p126 = scmp.ne.s32.totalorder %s118, %s121
      %p127 = scmp.eq.s32.totalorder %s18, 0
      %p128 = por %p126, %p127
      %p129 = scmp.ne.s32.totalorder %s118, %s121
      %p130 = scmp.eq.s32.totalorder %s23, 15
      %p131 = por %p129, %p130
      %p132 = scmp.ne.s32.totalorder %s121, %s122
      %p133 = scmp.eq.s32.totalorder %s23, 0
      %p134 = por %p132, %p133
      %p135 = scmp.ne.s32.totalorder %s121, %s122
      %p136 = scmp.eq.s32.totalorder %s24, 15
      %p137 = por %p135, %p136
      %p139 = scmp.ne.s32.totalorder %s122, %s138
      %p140 = scmp.eq.s32.totalorder %s24, 0
      %p141 = por %p139, %p140
      %s142 = ssub.s32 %s26, %s33
      %p143 = scmp.eq.s32.totalorder %s142, 0
      %s145 = sadd.s32 %s144, 1
      %s146 = scalar_select %p143, %s144, %s145
      %p149 = pneg %p143
      %p150 = scmp.eq.s32.totalorder %s18, 15
      %p151 = por %p149, %p150
      %p152 = scmp.ne.s32.totalorder %s144, %s147
      %p153 = scmp.eq.s32.totalorder %s18, 0
      %p154 = por %p152, %p153
      %p155 = scmp.ne.s32.totalorder %s144, %s147
      %p156 = scmp.eq.s32.totalorder %s23, 15
      %p157 = por %p155, %p156
      %p158 = scmp.ne.s32.totalorder %s147, %s148
      %p159 = scmp.eq.s32.totalorder %s23, 0
      %p160 = por %p158, %p159
      %p161 = scmp.ne.s32.totalorder %s147, %s148
      %p162 = scmp.eq.s32.totalorder %s24, 15
      %p163 = por %p161, %p162
      %p165 = scmp.ne.s32.totalorder %s148, %s164
      %p166 = scmp.eq.s32.totalorder %s24, 0
      %p167 = por %p165, %p166
      %s169 = sadd.s32 %s168, 1
      %p172 = scmp.eq.s32.totalorder %s18, 15
      %p173 = scmp.ne.s32.totalorder %s168, %s170
      %p174 = scmp.eq.s32.totalorder %s18, 0
      %p175 = por %p173, %p174
      %p176 = scmp.ne.s32.totalorder %s168, %s170
      %p177 = scmp.eq.s32.totalorder %s23, 15
      %p178 = por %p176, %p177
      %p179 = scmp.ne.s32.totalorder %s170, %s171
      %p180 = scmp.eq.s32.totalorder %s23, 0
      %p181 = por %p179, %p180
      %p182 = scmp.ne.s32.totalorder %s170, %s171
      %p183 = scmp.eq.s32.totalorder %s24, 15
      %p184 = por %p182, %p183
      %p186 = scmp.ne.s32.totalorder %s171, %s185
      %p187 = scmp.eq.s32.totalorder %s24, 0
      %p188 = por %p186, %p187
      %s189 = ssub.s32 %s25, %s37
      %p190 = scmp.eq.s32.totalorder %s189, 0
      %s192 = sadd.s32 %s191, 1
      %s193 = scalar_select %p190, %s191, %s192
      %p196 = pneg %p190
      %p197 = scmp.eq.s32.totalorder %s18, 15
      %p198 = por %p196, %p197
      %p199 = scmp.ne.s32.totalorder %s191, %s194
      %p200 = scmp.eq.s32.totalorder %s18, 0
      %p201 = por %p199, %p200
      %p202 = scmp.ne.s32.totalorder %s191, %s194
      %p203 = scmp.eq.s32.totalorder %s23, 15
      %p204 = por %p202, %p203
      %p205 = scmp.ne.s32.totalorder %s194, %s195
      %p206 = scmp.eq.s32.totalorder %s23, 0
      %p207 = por %p205, %p206
      %p208 = scmp.ne.s32.totalorder %s194, %s195
      %p209 = scmp.eq.s32.totalorder %s24, 15
      %p210 = por %p208, %p209
      %p212 = scmp.ne.s32.totalorder %s195, %s211
      %p213 = scmp.eq.s32.totalorder %s24, 0
      %p214 = por %p212, %p213
      %p215 = scmp.le.s32.totalorder 1, %s18
      %p216 = scmp.lt.s32.totalorder %s18, 17
      %p217 = pnand %p215, %p216
      %p218 = pneg %p217
      // Predicated region
      $region9: #{tpu_custom_call.1} parent=5 // pred_check
        _
      $region10: #{tpu_custom_call.1} parent=5 // pred_check_branch
        %220 = sbr.rel (%p217) target = $region12
      $region11: #{tpu_custom_call.1} parent=5 // pred_region
        %s221 = ssub.s32 %s18, 1
        // Predicated region
        $region13: #{tpu_custom_call.1} parent=11 // pred_check
          %p222 = pneg %p181
        $region14: #{tpu_custom_call.1} parent=11 // pred_check_branch
          %224 = sbr.rel (%p222) target = $region16
        $region15: #{tpu_custom_call.1} parent=11 // pred_region
          _
        $region16: #{tpu_custom_call.1} parent=11 // pred_fallthru
          _
      $region12: #{tpu_custom_call.1} parent=5 // pred_fallthru
        _
      %p225 = scmp.lt.s32.totalorder %s18, 16
      // Predicated region
      $region17: #{tpu_custom_call.1} parent=5 // pred_check
        %p226 = pneg %p225
      $region18: #{tpu_custom_call.1} parent=5 // pred_check_branch
        %228 = sbr.rel (%p226) target = $region20
      $region19: #{tpu_custom_call.1} parent=5 // pred_region
        // Predicated region
        $region21: #{tpu_custom_call.1} parent=19 // pred_check
          %p229 = pneg %p50
        $region22: #{tpu_custom_call.1} parent=19 // pred_check_branch
          %231 = sbr.rel (%p229) target = $region24
        $region23: #{tpu_custom_call.1} parent=19 // pred_region
          %s232 = sand.u32 %s40, 1
          %s233 = scalar_lea.sflag [#allocation4], %s232
          %s234 = sand.u32 %s40, 1
          %s235 = smul.addr %s234, 8
          %s236 = scalar_lea.vmem [#allocation3], %s235
          %s238 = ssub.s32 128, 128
          %239 = vsyncadd %s233, %s238
          %s240 = smul.addr %s25, 128
          %s241 = scalar_lea.hbm %s0, %s240
          %s243 = sshll.u32 %s236, 4
          %s244 = int_to_ptr.vmem [resolvable:$true] %s243
          %246 = dma.hbm_to_vmem [thread:$0]  %s241, 128, %s244, %s233
        $region24: #{tpu_custom_call.1} parent=19 // pred_fallthru
          _
        // Predicated region
        $region25: #{tpu_custom_call.1} parent=19 // pred_check
          %p247 = pneg %p76
        $region26: #{tpu_custom_call.1} parent=19 // pred_check_branch
          %249 = sbr.rel (%p247) target = $region28
        $region27: #{tpu_custom_call.1} parent=19 // pred_region
          %p250 = scmp.lt.s32.totalorder %s26, 7
          %s251 = scalar_select %p250, %s26, 7
          %s252 = smul.addr %s251, 4
          %s253 = smul.addr %s252, 4
          %s254 = scalar_lea.vmem %s1, %s253
        $region28: #{tpu_custom_call.1} parent=19 // pred_fallthru
          _
        // Predicated region
        $region29: #{tpu_custom_call.1} parent=19 // pred_check
          %p255 = pneg %p102
        $region30: #{tpu_custom_call.1} parent=19 // pred_check_branch
          %257 = sbr.rel (%p255) target = $region32
        $region31: #{tpu_custom_call.1} parent=19 // pred_region
          %p258 = scmp.lt.s32.totalorder %s26, 7
          %s259 = scalar_select %p258, %s26, 7
          %s260 = smul.addr %s259, 4
          %s261 = smul.addr %s260, 4
          %s262 = scalar_lea.vmem %s2, %s261
        $region32: #{tpu_custom_call.1} parent=19 // pred_fallthru
          _
        // Predicated region
        $region33: #{tpu_custom_call.1} parent=19 // pred_check
          %p263 = pneg %p128
        $region34: #{tpu_custom_call.1} parent=19 // pred_check_branch
          %265 = sbr.rel (%p263) target = $region36
        $region35: #{tpu_custom_call.1} parent=19 // pred_region
          %p266 = scmp.lt.s32.totalorder %s26, 7
          %s267 = scalar_select %p266, %s26, 7
          %s268 = smul.addr %s267, 4
          %s269 = smul.addr %s268, 4
          %s270 = scalar_lea.vmem %s3, %s269
        $region36: #{tpu_custom_call.1} parent=19 // pred_fallthru
          _
        // Predicated region
        $region37: #{tpu_custom_call.1} parent=19 // pred_check
          %p271 = pneg %p154
        $region38: #{tpu_custom_call.1} parent=19 // pred_check_branch
          %273 = sbr.rel (%p271) target = $region40
        $region39: #{tpu_custom_call.1} parent=19 // pred_region
          %p274 = scmp.lt.s32.totalorder %s26, 7
          %s275 = scalar_select %p274, %s26, 7
          %s276 = smul.addr %s275, 8
          %s277 = smul.addr %s276, 4
          %s278 = scalar_lea.vmem %s4, %s277
        $region40: #{tpu_custom_call.1} parent=19 // pred_fallthru
          _
      $region20: #{tpu_custom_call.1} parent=5 // pred_fallthru
        _
      %p279 = scmp.le.s32.totalorder 1, %s18
      %p280 = scmp.lt.s32.totalorder %s18, 17
      %p281 = pnand %p279, %p280
      %p282 = pneg %p281
      // Predicated region
      $region41: #{tpu_custom_call.1} parent=5 // pred_check
        _
      $region42: #{tpu_custom_call.1} parent=5 // pred_check_branch
        %284 = sbr.rel (%p281) target = $region44
      $region43: #{tpu_custom_call.1} parent=5 // pred_region
        %s285 = ssub.s32 %s18, 1
        %s286 = sand.u32 %s43, 1
        %s287 = scalar_lea.sflag [#allocation4], %s286
        %s288 = sand.u32 %s43, 1
        %s289 = smul.addr %s288, 8
        %s290 = scalar_lea.vmem [#allocation3], %s289
        // Predicated region
        $region45: #{tpu_custom_call.1} parent=43 // pred_check
          %p291 = pneg %p56
        $region46: #{tpu_custom_call.1} parent=43 // pred_check_branch
          %293 = sbr.rel (%p291) target = $region48
        $region47: #{tpu_custom_call.1} parent=43 // pred_region
          %294 = dma.done %s287, 128
        $region48: #{tpu_custom_call.1} parent=43 // pred_fallthru
          _
        %s295 = sand.u32 %s43, 1
        %s296 = scalar_lea.sflag [#allocation4], %s295
        %s297 = sand.u32 %s43, 1
        %s298 = smul.addr %s297, 8
        %s299 = scalar_lea.vmem [#allocation3], %s298
        %p300 = pneg %p56
        %p301 = pneg %p53
        %p302 = scmp.lt.s32.totalorder %s28, 7
        %s303 = scalar_select %p302, %s28, 7
        %s304 = smul.addr %s303, 4
        %s305 = smul.addr %s304, 4
        %s306 = scalar_lea.vmem %s1, %s305
        %p307 = pneg %p82
        %p308 = pneg %p79
        %p309 = scmp.lt.s32.totalorder %s28, 7
        %s310 = scalar_select %p309, %s28, 7
        %s311 = smul.addr %s310, 4
        %s312 = smul.addr %s311, 4
        %s313 = scalar_lea.vmem %s2, %s312
        %p314 = pneg %p108
        %p315 = pneg %p105
        %p316 = scmp.lt.s32.totalorder %s28, 7
        %s317 = scalar_select %p316, %s28, 7
        %s318 = smul.addr %s317, 4
        %s319 = smul.addr %s318, 4
        %s320 = scalar_lea.vmem %s3, %s319
        %p321 = pneg %p134
        %p322 = pneg %p131
        %p323 = scmp.lt.s32.totalorder %s28, 7
        %s324 = scalar_select %p323, %s28, 7
        %s325 = smul.addr %s324, 8
        %s326 = smul.addr %s325, 4
        %s327 = scalar_lea.vmem %s4, %s326
        %p328 = pneg %p160
        %p329 = pneg %p157
        %p330 = pneg %p181
        %p331 = pneg %p178
        %p332 = pneg %p207
        %p333 = pneg %p204
        %s334 = sand.u32 %s194, 1
        %s335 = scalar_lea.sflag [#allocation5], %s334
        %s336 = sand.u32 %s194, 1
        %s337 = smul.addr %s336, 8
        %s338 = scalar_lea.vmem [#allocation6], %s337
        %p339 = scmp.lt.s32.totalorder %s28, 7
        %s340 = scalar_select %p339, %s28, 7
        %s341 = smul.addr %s340, 4
        %s342 = smul.addr %s341, 4
        %s343 = scalar_lea.vmem %s1, %s342
        %p344 = scmp.lt.s32.totalorder %s28, 7
        %s345 = scalar_select %p344, %s28, 7
        %s346 = smul.addr %s345, 4
        %s347 = smul.addr %s346, 4
        %s348 = scalar_lea.vmem %s2, %s347
        %p349 = scmp.lt.s32.totalorder %s28, 7
        %s350 = scalar_select %p349, %s28, 7
        %s351 = smul.addr %s350, 4
        %s352 = smul.addr %s351, 4
        %s353 = scalar_lea.vmem %s3, %s352
        %p354 = scmp.lt.s32.totalorder %s28, 7
        %s355 = scalar_select %p354, %s28, 7
        %s356 = smul.addr %s355, 8
        %s357 = smul.addr %s356, 4
        %s358 = scalar_lea.vmem %s4, %s357
        %p360 = scmp.eq.s32.totalorder %s28, 0
        // Predicated region
        $region49: #{tpu_custom_call.1} parent=43 // pred_check
          %p361 = pneg %p360
        $region50: #{tpu_custom_call.1} parent=43 // pred_check_branch
          %363 = sbr.rel (%p361) target = $region52
        $region51: #{tpu_custom_call.1} parent=43 // pred_region
          %vm364 = vcmask 261120
          %365 = vst.msk [vmem:[#allocation2] sm:$0xff] %vm364, 0.0
        $region52: #{tpu_custom_call.1} parent=43 // pred_fallthru
          _
        %v366 = vld [vmem:[%s343] sm:$0xf]
        %v367 = vld [vmem:[%s343 + $0x4] sm:$0xf]
        %v368 = vld [vmem:[%s343 + $0x8] sm:$0xf]
        %v369 = vld [vmem:[%s343 + $0xc] sm:$0xf]
        %v370 = vld [vmem:[%s348] sm:$0xf]
        %v371 = vld [vmem:[%s348 + $0x4] sm:$0xf]
        %v372 = vld [vmem:[%s348 + $0x8] sm:$0xf]
        %v373 = vld [vmem:[%s348 + $0xc] sm:$0xf]
        %v374 = vld [vmem:[%s353] sm:$0xf]
        %v375 = vld [vmem:[%s353 + $0x4] sm:$0xf]
        %v376 = vld [vmem:[%s353 + $0x8] sm:$0xf]
        %v377 = vld [vmem:[%s353 + $0xc] sm:$0xf]
        %v378 = vld [vmem:[%s358] sm:$0xf]
        %v379 = vld [vmem:[%s358 + $0x4] sm:$0xf]
        %v380 = vld [vmem:[%s358 + $0x8] sm:$0xf]
        %v381 = vld [vmem:[%s358 + $0xc] sm:$0xf]
        %v382 = vld [vmem:[%s358 + $0x10] sm:$0xf]
        %v383 = vld [vmem:[%s358 + $0x14] sm:$0xf]
        %v384 = vld [vmem:[%s358 + $0x18] sm:$0xf]
        %v385 = vld [vmem:[%s358 + $0x1c] sm:$0xf]
        %v386 = vld [vmem:[%s290] sm:$0xff]
        %v387 = vpack.c.bf16 %v386, %v386
        %v392 = vunpack.c.l.b16 %v366
        %v393 = vunpack.c.l.b16 %v367
        %v394 = vunpack.c.l.b16 %v368
        %v395 = vunpack.c.l.b16 %v369
        %v396 = vpack.c.b16 %v393, %v392
        %v397 = vpack.c.b16 %v395, %v394
        %vm400 = vcmask 261120
        %v402 = vsel %vm400, %v387, 0
        %404 = vmatprep.subr.bf16.mxu0 0
        %405 = vmatpush1.bf16.msra.mxu0 %v396
        %406 = vmatprep.subr.bf16.mxu0 0
        %407 = vmatpush1.bf16.msra.mxu0 %v397
        %408 = vmatprep.subr.bf16.mxu0 0
        %409 = vmatpush1.bf16.msra.mxu0 0
        %410 = vmatprep.subr.bf16.mxu0 0
        %411 = vmatpush1.bf16.msra.mxu0 0
        %412 = vmatprep.subr.bf16.mxu0 0
        %413 = vmatpush1.bf16.msra.mxu0 0
        %414 = vmatprep.subr.bf16.mxu0 0
        %415 = vmatpush1.bf16.msra.mxu0 0
        %416 = vmatprep.subr.bf16.mxu0 0
        %417 = vmatpush1.bf16.msra.mxu0 0
        %418 = vmatprep.subr.bf16.mxu0 0
        %419 = vmatpush1.bf16.msra.mxu0 0
        %420 = vmatprep.subr.bf16.mxu0 0
        %421 = vmatpush1.bf16.msra.mxu0 0
        %422 = vmatprep.subr.bf16.mxu0 0
        %423 = vmatpush1.bf16.msra.mxu0 0
        %424 = vmatprep.subr.bf16.mxu0 0
        %425 = vmatpush1.bf16.msra.mxu0 0
        %426 = vmatprep.subr.bf16.mxu0 0
        %427 = vmatpush1.bf16.msra.mxu0 0
        %428 = vmatprep.subr.bf16.mxu0 0
        %429 = vmatpush1.bf16.msra.mxu0 0
        %430 = vmatprep.subr.bf16.mxu0 0
        %431 = vmatpush1.bf16.msra.mxu0 0
        %432 = vmatprep.subr.bf16.mxu0 0
        %433 = vmatpush1.bf16.msra.mxu0 0
        %434 = vmatprep.subr.bf16.mxu0 0
        %435 = vmatpush1.bf16.msra.mxu0 0
        %436 = vmatprep.mubr.bf16.mxu0 0
        %437 = vmatmul.mubr.bf16.gmra.mrb[0].mxu0 %v402
        %v438 = vpop.f32.mrb[0].mxu0
        %v439 = vadd.f32 0.0, %v438
        %v440 = vpop.f32.mrb[0].mxu0
        %v441 = vpop.f32.mrb[0].mxu0
        %v442 = vpop.f32.mrb[0].mxu0
        %443 = vdwg.mxu0
        %v448 = vunpack.c.l.b16 %v370
        %v449 = vunpack.c.l.b16 %v371
        %v450 = vunpack.c.l.b16 %v372
        %v451 = vunpack.c.l.b16 %v373
        %v452 = vpack.c.b16 %v449, %v448
        %v453 = vpack.c.b16 %v451, %v450
        %456 = vmatprep.subr.bf16.mxu0 0
        %457 = vmatpush1.bf16.msra.mxu0 %v452
        %458 = vmatprep.subr.bf16.mxu0 0
        %459 = vmatpush1.bf16.msra.mxu0 %v453
        %460 = vmatprep.subr.bf16.mxu0 0
        %461 = vmatpush1.bf16.msra.mxu0 0
        %462 = vmatprep.subr.bf16.mxu0 0
        %463 = vmatpush1.bf16.msra.mxu0 0
        %464 = vmatprep.subr.bf16.mxu0 0
        %465 = vmatpush1.bf16.msra.mxu0 0
        %466 = vmatprep.subr.bf16.mxu0 0
        %467 = vmatpush1.bf16.msra.mxu0 0
        %468 = vmatprep.subr.bf16.mxu0 0
        %469 = vmatpush1.bf16.msra.mxu0 0
        %470 = vmatprep.subr.bf16.mxu0 0
        %471 = vmatpush1.bf16.msra.mxu0 0
        %472 = vmatprep.subr.bf16.mxu0 0
        %473 = vmatpush1.bf16.msra.mxu0 0
        %474 = vmatprep.subr.bf16.mxu0 0
        %475 = vmatpush1.bf16.msra.mxu0 0
        %476 = vmatprep.subr.bf16.mxu0 0
        %477 = vmatpush1.bf16.msra.mxu0 0
        %478 = vmatprep.subr.bf16.mxu0 0
        %479 = vmatpush1.bf16.msra.mxu0 0
        %480 = vmatprep.subr.bf16.mxu0 0
        %481 = vmatpush1.bf16.msra.mxu0 0
        %482 = vmatprep.subr.bf16.mxu0 0
        %483 = vmatpush1.bf16.msra.mxu0 0
        %484 = vmatprep.subr.bf16.mxu0 0
        %485 = vmatpush1.bf16.msra.mxu0 0
        %486 = vmatprep.subr.bf16.mxu0 0
        %487 = vmatpush1.bf16.msra.mxu0 0
        %488 = vmatprep.mubr.bf16.mxu0 0
        %489 = vmatmul.mubr.bf16.gmra.mrb[0].mxu0 %v402
        %v490 = vpop.f32.mrb[0].mxu0
        %v491 = vadd.f32 0.0, %v490
        %v492 = vpop.f32.mrb[0].mxu0
        %v493 = vpop.f32.mrb[0].mxu0
        %v494 = vpop.f32.mrb[0].mxu0
        %495 = vdwg.mxu0
        %v500 = vunpack.c.l.b16 %v374
        %v501 = vunpack.c.l.b16 %v375
        %v502 = vunpack.c.l.b16 %v376
        %v503 = vunpack.c.l.b16 %v377
        %v504 = vpack.c.b16 %v501, %v500
        %v505 = vpack.c.b16 %v503, %v502
        %508 = vmatprep.subr.bf16.mxu0 0
        %509 = vmatpush1.bf16.msra.mxu0 %v504
        %510 = vmatprep.subr.bf16.mxu0 0
        %511 = vmatpush1.bf16.msra.mxu0 %v505
        %512 = vmatprep.subr.bf16.mxu0 0
        %513 = vmatpush1.bf16.msra.mxu0 0
        %514 = vmatprep.subr.bf16.mxu0 0
        %515 = vmatpush1.bf16.msra.mxu0 0
        %516 = vmatprep.subr.bf16.mxu0 0
        %517 = vmatpush1.bf16.msra.mxu0 0
        %518 = vmatprep.subr.bf16.mxu0 0
        %519 = vmatpush1.bf16.msra.mxu0 0
        %520 = vmatprep.subr.bf16.mxu0 0
        %521 = vmatpush1.bf16.msra.mxu0 0
        %522 = vmatprep.subr.bf16.mxu0 0
        %523 = vmatpush1.bf16.msra.mxu0 0
        %524 = vmatprep.subr.bf16.mxu0 0
        %525 = vmatpush1.bf16.msra.mxu0 0
        %526 = vmatprep.subr.bf16.mxu0 0
        %527 = vmatpush1.bf16.msra.mxu0 0
        %528 = vmatprep.subr.bf16.mxu0 0
        %529 = vmatpush1.bf16.msra.mxu0 0
        %530 = vmatprep.subr.bf16.mxu0 0
        %531 = vmatpush1.bf16.msra.mxu0 0
        %532 = vmatprep.subr.bf16.mxu0 0
        %533 = vmatpush1.bf16.msra.mxu0 0
        %534 = vmatprep.subr.bf16.mxu0 0
        %535 = vmatpush1.bf16.msra.mxu0 0
        %536 = vmatprep.subr.bf16.mxu0 0
        %537 = vmatpush1.bf16.msra.mxu0 0
        %538 = vmatprep.subr.bf16.mxu0 0
        %539 = vmatpush1.bf16.msra.mxu0 0
        %540 = vmatprep.mubr.bf16.mxu0 0
        %541 = vmatmul.mubr.bf16.gmra.mrb[0].mxu0 %v402
        %v542 = vpop.f32.mrb[0].mxu0
        %v543 = vadd.f32 0.0, %v542
        %v544 = vpop.f32.mrb[0].mxu0
        %v545 = vpop.f32.mrb[0].mxu0
        %v546 = vpop.f32.mrb[0].mxu0
        %547 = vdwg.mxu0
        %v548 = vpack.c.bf16 %v439, %v439
        %v549 = vpack.c.bf16 %v491, %v491
        %vm550 = vcmask 523264
        %v552 = vsel %vm550, %v548, 0
        %v555 = vsel %vm550, %v549, 0
        %557 = vmatprep.subr.bf16.mxu0 0
        %558 = vmatpush1.bf16.xpose.msra.mxu0 %v555
        %559 = vmatprep.subr.bf16.mxu0 0
        %560 = vmatpush1.bf16.xpose.msra.mxu0 0
        %561 = vmatprep.subr.bf16.mxu0 0
        %562 = vmatpush1.bf16.xpose.msra.mxu0 0
        %563 = vmatprep.subr.bf16.mxu0 0
        %564 = vmatpush1.bf16.xpose.msra.mxu0 0
        %565 = vmatprep.subr.bf16.mxu0 0
        %566 = vmatpush1.bf16.xpose.msra.mxu0 0
        %567 = vmatprep.subr.bf16.mxu0 0
        %568 = vmatpush1.bf16.xpose.msra.mxu0 0
        %569 = vmatprep.subr.bf16.mxu0 0
        %570 = vmatpush1.bf16.xpose.msra.mxu0 0
        %571 = vmatprep.subr.bf16.mxu0 0
        %572 = vmatpush1.bf16.xpose.msra.mxu0 0
        %573 = vmatprep.subr.bf16.mxu0 0
        %574 = vmatpush1.bf16.xpose.msra.mxu0 0
        %575 = vmatprep.subr.bf16.mxu0 0
        %576 = vmatpush1.bf16.xpose.msra.mxu0 0
        %577 = vmatprep.subr.bf16.mxu0 0
        %578 = vmatpush1.bf16.xpose.msra.mxu0 0
        %579 = vmatprep.subr.bf16.mxu0 0
        %580 = vmatpush1.bf16.xpose.msra.mxu0 0
        %581 = vmatprep.subr.bf16.mxu0 0
        %582 = vmatpush1.bf16.xpose.msra.mxu0 0
        %583 = vmatprep.subr.bf16.mxu0 0
        %584 = vmatpush1.bf16.xpose.msra.mxu0 0
        %585 = vmatprep.subr.bf16.mxu0 0
        %586 = vmatpush1.bf16.xpose.msra.mxu0 0
        %587 = vmatprep.subr.bf16.mxu0 0
        %588 = vmatpush1.bf16.xpose.msra.mxu0 0
        %589 = vmatprep.mubr.bf16.mxu0 0
        %590 = vmatmul.mubr.bf16.gmra.mrb[0].mxu0 %v552
        %v591 = vpop.f32.mrb[0].mxu0
        %v592 = vadd.f32 0.0, %v591
        %v593 = vpop.f32.mrb[0].mxu0
        %v594 = vpop.f32.mrb[0].mxu0
        %v595 = vpop.f32.mrb[0].mxu0
        %596 = vdwg.mxu0
        %vm597 = vcmask 64512
        %v598 = vsel %vm597, %v592, -inf
        %599 = vmax.xlane.f32.xlu0 %v598
        %v600 = vpop.xlane.xlu0 %599
        %v601 = vsub.f32 %v592, %v600
        %v602 = vmul.f32 %v601, 1.442695
        %v603 = vpow.pop %v602
        %v604 = vsel %vm597, %v603, 0.0
        %605 = vadd.xlane.f32.xlu0 %v604
        %v606 = vpop.xlane.xlu0 %605
        %v607 = vpack.c.bf16 %v603, %v603
        %v608 = vpack.c.bf16 %v543, %v543
        %v610 = vsel %vm597, %v607, 0
        %vm612 = vcmask 1043456
        %v614 = vsel %vm612, %v608, 0
        %616 = vmatprep.subr.bf16.mxu0 0
        %617 = vmatpush1.bf16.msra.mxu0 %v614
        %618 = vmatprep.subr.bf16.mxu0 0
        %619 = vmatpush1.bf16.msra.mxu0 0
        %620 = vmatprep.subr.bf16.mxu0 0
        %621 = vmatpush1.bf16.msra.mxu0 0
        %622 = vmatprep.subr.bf16.mxu0 0
        %623 = vmatpush1.bf16.msra.mxu0 0
        %624 = vmatprep.subr.bf16.mxu0 0
        %625 = vmatpush1.bf16.msra.mxu0 0
        %626 = vmatprep.subr.bf16.mxu0 0
        %627 = vmatpush1.bf16.msra.mxu0 0
        %628 = vmatprep.subr.bf16.mxu0 0
        %629 = vmatpush1.bf16.msra.mxu0 0
        %630 = vmatprep.subr.bf16.mxu0 0
        %631 = vmatpush1.bf16.msra.mxu0 0
        %632 = vmatprep.subr.bf16.mxu0 0
        %633 = vmatpush1.bf16.msra.mxu0 0
        %634 = vmatprep.subr.bf16.mxu0 0
        %635 = vmatpush1.bf16.msra.mxu0 0
        %636 = vmatprep.subr.bf16.mxu0 0
        %637 = vmatpush1.bf16.msra.mxu0 0
        %638 = vmatprep.subr.bf16.mxu0 0
        %639 = vmatpush1.bf16.msra.mxu0 0
        %640 = vmatprep.subr.bf16.mxu0 0
        %641 = vmatpush1.bf16.msra.mxu0 0
        %642 = vmatprep.subr.bf16.mxu0 0
        %643 = vmatpush1.bf16.msra.mxu0 0
        %644 = vmatprep.subr.bf16.mxu0 0
        %645 = vmatpush1.bf16.msra.mxu0 0
        %646 = vmatprep.subr.bf16.mxu0 0
        %647 = vmatpush1.bf16.msra.mxu0 0
        %648 = vmatprep.mubr.bf16.mxu0 0
        %649 = vmatmul.mubr.bf16.gmra.mrb[0].mxu0 %v610
        %v650 = vpop.f32.mrb[0].mxu0
        %v651 = vadd.f32 0.0, %v650
        %v652 = vpop.f32.mrb[0].mxu0
        %v653 = vpop.f32.mrb[0].mxu0
        %v654 = vpop.f32.mrb[0].mxu0
        %655 = vdwg.mxu0
        %v656 = vrcp.pop %v606
        %v657 = vmul.f32 %v651, %v656
        %v658 = vld [vmem:[#allocation2] sm:$0xff]
        %v659 = vpack.c.bf16 %v657, %v657
        %v668 = vunpack.c.l.b16 %v378
        %v669 = vunpack.c.l.b16 %v379
        %v670 = vunpack.c.l.b16 %v380
        %v671 = vunpack.c.l.b16 %v381
        %v672 = vunpack.c.l.b16 %v382
        %v673 = vunpack.c.l.b16 %v383
        %v674 = vunpack.c.l.b16 %v384
        %v675 = vunpack.c.l.b16 %v385
        %v676 = vpack.c.b16 %v669, %v668
        %v677 = vpack.c.b16 %v671, %v670
        %v678 = vpack.c.b16 %v673, %v672
        %v679 = vpack.c.b16 %v675, %v674
        %v685 = vsel %vm550, %v659, 0
        %687 = vmatprep.subr.bf16.mxu0 0
        %688 = vmatpush1.bf16.msra.mxu0 %v676
        %689 = vmatprep.subr.bf16.mxu0 0
        %690 = vmatpush1.bf16.msra.mxu0 %v677
        %691 = vmatprep.subr.bf16.mxu0 0
        %692 = vmatpush1.bf16.msra.mxu0 %v678
        %693 = vmatprep.subr.bf16.mxu0 0
        %694 = vmatpush1.bf16.msra.mxu0 %v679
        %695 = vmatprep.subr.bf16.mxu0 0
        %696 = vmatpush1.bf16.msra.mxu0 0
        %697 = vmatprep.subr.bf16.mxu0 0
        %698 = vmatpush1.bf16.msra.mxu0 0
        %699 = vmatprep.subr.bf16.mxu0 0
        %700 = vmatpush1.bf16.msra.mxu0 0
        %701 = vmatprep.subr.bf16.mxu0 0
        %702 = vmatpush1.bf16.msra.mxu0 0
        %703 = vmatprep.subr.bf16.mxu0 0
        %704 = vmatpush1.bf16.msra.mxu0 0
        %705 = vmatprep.subr.bf16.mxu0 0
        %706 = vmatpush1.bf16.msra.mxu0 0
        %707 = vmatprep.subr.bf16.mxu0 0
        %708 = vmatpush1.bf16.msra.mxu0 0
        %709 = vmatprep.subr.bf16.mxu0 0
        %710 = vmatpush1.bf16.msra.mxu0 0
        %711 = vmatprep.subr.bf16.mxu0 0
        %712 = vmatpush1.bf16.msra.mxu0 0
        %713 = vmatprep.subr.bf16.mxu0 0
        %714 = vmatpush1.bf16.msra.mxu0 0
        %715 = vmatprep.subr.bf16.mxu0 0
        %716 = vmatpush1.bf16.msra.mxu0 0
        %717 = vmatprep.subr.bf16.mxu0 0
        %718 = vmatpush1.bf16.msra.mxu0 0
        %719 = vmatprep.mubr.bf16.mxu0 0
        %720 = vmatmul.mubr.bf16.gmra.mrb[0].mxu0 %v685
        %v721 = vpop.f32.mrb[0].mxu0
        %v722 = vadd.f32 0.0, %v721
        %v723 = vpop.f32.mrb[0].mxu0
        %v724 = vpop.f32.mrb[0].mxu0
        %v725 = vpop.f32.mrb[0].mxu0
        %726 = vdwg.mxu0
        %v727 = vadd.f32 %v658, %v722
        %728 = vst.msk [vmem:[#allocation2] sm:$0xff] %vm400, %v727
        %p729 = scmp.eq.s32.totalorder %s28, 7
        // Predicated region
        $region53: #{tpu_custom_call.1} parent=43 // pred_check
          %p730 = pneg %p729
        $region54: #{tpu_custom_call.1} parent=43 // pred_check_branch
          %732 = sbr.rel (%p730) target = $region56
        $region55: #{tpu_custom_call.1} parent=43 // pred_region
          %v733 = vld [vmem:[#allocation2] sm:$0xff]
          %v734 = vld [vmem:[%s5] sm:$0x1]
          %v736 = vlaneseq
          %v737 = vshrl.u32 %v736, 7
          %v738 = vsub.s32 0, %v737
          %v739 = vrot.slane %v734, %v738
          %v741 = vadd.f32 %v733, %v739
          %742 = vst.msk [vmem:[%s338] sm:$0xff] %vm400, %v741
        $region56: #{tpu_custom_call.1} parent=43 // pred_fallthru
          _
        %s743 = sand.u32 %s194, 1
        %s744 = scalar_lea.sflag [#allocation5], %s743
        %s745 = sand.u32 %s194, 1
        %s746 = smul.addr %s745, 8
        %s747 = scalar_lea.vmem [#allocation6], %s746
        // Predicated region
        $region57: #{tpu_custom_call.1} parent=43 // pred_check
          %p748 = pneg %p204
        $region58: #{tpu_custom_call.1} parent=43 // pred_check_branch
          %750 = sbr.rel (%p748) target = $region60
        $region59: #{tpu_custom_call.1} parent=43 // pred_region
          %s752 = ssub.s32 128, 128
          %753 = vsyncadd %s744, %s752
          %s754 = smul.addr %s27, 128
          %s755 = scalar_lea.hbm %s6, %s754
          %s757 = sshll.u32 %s747, 4
          %s758 = int_to_ptr.vmem [resolvable:$true] %s757
          %760 = dma.vmem_to_hbm [thread:$0]  %s758, 128, %s755, %s744
        $region60: #{tpu_custom_call.1} parent=43 // pred_fallthru
          _
      $region44: #{tpu_custom_call.1} parent=5 // pred_fallthru
        _
      %p761 = scmp.le.s32.totalorder 2, %s18
      // Predicated region
      $region61: #{tpu_custom_call.1} parent=5 // pred_check
        %p762 = pneg %p761
      $region62: #{tpu_custom_call.1} parent=5 // pred_check_branch
        %764 = sbr.rel (%p762) target = $region64
      $region63: #{tpu_custom_call.1} parent=5 // pred_region
        %s765 = ssub.s32 %s18, 2
        // Predicated region
        $region65: #{tpu_custom_call.1} parent=63 // pred_check
          %p766 = pneg %p210
        $region66: #{tpu_custom_call.1} parent=63 // pred_check_branch
          %768 = sbr.rel (%p766) target = $region68
        $region67: #{tpu_custom_call.1} parent=63 // pred_region
          %s769 = sand.u32 %s195, 1
          %s770 = scalar_lea.sflag [#allocation5], %s769
          %s771 = sand.u32 %s195, 1
          %s772 = smul.addr %s771, 8
          %s773 = scalar_lea.vmem [#allocation6], %s772
          %774 = dma.done %s770, 128
        $region68: #{tpu_custom_call.1} parent=63 // pred_fallthru
          _
      $region64: #{tpu_custom_call.1} parent=5 // pred_fallthru
        _
    $region6: #{tpu_custom_call.1} parent=1 // loop_footer
      %s22 = sadd.s32 1, %s18
    $region7: #{tpu_custom_call.1} parent=1 // loop_footer_branch
      %17 = sbr.rel target = $region3
    $region8: #{tpu_custom_call.1} parent=1 // loop_exit
      _
    %775 = vsyncpa [#allocation4], 1
    %s776 = scalar_lea.sflag [#allocation4], 1
    %777 = vsyncpa %s776, 1
    %778 = vsyncpa [#allocation5], 1
    %s779 = scalar_lea.sflag [#allocation5], 1
    %780 = vsyncpa %s779, 1

</llo_original>
